<compile_context>
chip_gen: v7x
topology: tpu7x:2x2x1
jax: 0.10.0
libtpu: 0.0.40
codegen_flags: <defaults>
</compile_context>

<pallas_src>
import jax
import jax.numpy as jnp
from jax import lax
from jax.experimental import pallas as pl
from jax.experimental.pallas import tpu as pltpu


def _make_stats_kernel(W, cf, valid_rows_end, roll_shift):
    """Pass 1: per-tile partial sum / sum-of-squares of the masked conv output.

    roll_shift = L - W, so roll(x)[n, i] == x[n, (i + W) % L]  ("row h+1").
    """

    def kernel(params_ref, x_ref, part_ref):
        # params_ref (SMEM f32[2]): [w0, w1]
        x = x_ref[...]                                    # (TN, L)
        w0 = params_ref[0]
        w1 = params_ref[1]

        # Conv2d(1, 1, [2, 1]): y[n, h, w] = w0*x[n, h, w] + w1*x[n, h+1, w].
        # "Row h+1, same column" is a lane rotation by W (XLU slot, hidden
        # under the streaming VPU / DMA work).
        x_next = pltpu.roll(x, shift=roll_shift, axis=1)
        y = w0 * x + w1 * x_next

        # In-kernel static mask over flattened positions that feed the BN
        # statistics: MRI columns (col >= cf) of valid conv rows (row < H-1).
        flat = lax.broadcasted_iota(jnp.int32, x.shape, 1)
        valid = ((flat % W) >= cf) & (flat < valid_rows_end)
        ym = jnp.where(valid, y, 0.0)

        s = jnp.sum(ym)
        s2 = jnp.sum(ym * ym)

        # One lane-dense (8,128) partial row per tile: sum in lane 0,
        # sum-of-squares in lane 1 of sublane 0, zeros elsewhere.
        lane = lax.broadcasted_iota(jnp.int32, (8, 128), 1)
        sub = lax.broadcasted_iota(jnp.int32, (8, 128), 0)
        row0 = sub == 0
        part = jnp.where(row0 & (lane == 0), s,
                         jnp.where(row0 & (lane == 1), s2, 0.0))
        part_ref[0] = part

    return kernel


def _make_norm_kernel(roll_shift):
    """Pass 2: conv + folded BN scale/shift + leaky_relu(0.1)."""

    def kernel(params_ref, x_ref, out_ref):
        # params_ref (SMEM f32[4]): [w0, w1, a, b] with
        #   a = gamma * rsqrt(var + eps), b = beta - mean * a.
        x = x_ref[...]                                    # (TN, L)
        x_next = pltpu.roll(x, shift=roll_shift, axis=1)
        y = params_ref[0] * x + params_ref[1] * x_next
        z = params_ref[2] * y + params_ref[3]
        out_ref[...] = jnp.maximum(z, 0.1 * z)

    return kernel


def _choose_tile(N, L, max_block_bytes=2 << 20):
    """Rows per tile (multiple of 8, or the full batch), keeping L whole."""
    rows = max(8, ((max_block_bytes // (4 * L)) // 8) * 8)
    if N <= rows:
        return N, N                         # single block = full array dims
    n_pad = ((N + rows - 1) // rows) * rows
    return rows, n_pad


def longitudinal_ccnn_2_forward(inputs, conv_w, bn_gamma, bn_beta,
                                clinical_f_n, eps=1e-5):
    """inputs: (N, 1, H, W) f32.  conv_w: (1, 1, 2, 1).  Returns (clinical, x)."""
    N, C, H, W = inputs.shape
    assert C == 1, "module is defined for a single input channel"
    Wm = W - clinical_f_n
    Ho = H - 1
    L = H * W

    # Lane-dense slab; contiguous reshape, no relayout copy before the kernel.
    x_flat = inputs.reshape(N, L)

    TN, N_pad = _choose_tile(N, L)
    if N_pad != N:
        # Zero rows contribute exactly 0 to both partial sums and are sliced
        # off after the normalize pass, so padding is semantics-preserving.
        x_flat = jnp.pad(x_flat, ((0, N_pad - N), (0, 0)))
    num_tiles = N_pad // TN

    cparams = pltpu.CompilerParams(
        dimension_semantics=("parallel",),          # per-tile independent work
        vmem_limit_bytes=32 * 1024 * 1024,          # explicit; blocks sized << this
    )

    w0 = conv_w[0, 0, 0, 0].astype(jnp.float32)
    w1 = conv_w[0, 0, 1, 0].astype(jnp.float32)
    conv_params = jnp.stack([w0, w1])

    # ---- Pass 1: per-tile partial statistics (parallel grid, no accumulator).
    partials = pl.pallas_call(
        _make_stats_kernel(W, clinical_f_n, Ho * W, L - W),
        out_shape=jax.ShapeDtypeStruct((num_tiles, 8, 128), jnp.float32),
        grid=(num_tiles,),
        in_specs=[
            pl.BlockSpec(memory_space=pltpu.MemorySpace.SMEM),   # scalar params
            pl.BlockSpec((TN, L), lambda i: (i, 0)),             # input slab tile
        ],
        out_specs=pl.BlockSpec((1, 8, 128), lambda i: (i, 0, 0)),
        compiler_params=cparams,
    )(conv_params, x_flat)

    # Tiny cross-tile reduction + BN scalar folding in XLA (negligible cost).
    count = float(N * Ho * Wm)
    s = jnp.sum(partials[:, 0, 0])
    s2 = jnp.sum(partials[:, 0, 1])
    mean = s / count
    var = jnp.maximum(s2 / count - mean * mean, 0.0)   # clamp f32 cancellation
    a = (bn_gamma[0] * lax.rsqrt(var + eps)).astype(jnp.float32)
    b = (bn_beta[0] - mean * a).astype(jnp.float32)
    norm_params = jnp.stack([w0, w1, a, b])

    # ---- Pass 2: normalize + leaky_relu, streaming tile-by-tile.
    out_flat = pl.pallas_call(
        _make_norm_kernel(L - W),
        out_shape=jax.ShapeDtypeStruct((N_pad, L), jnp.float32),
        grid=(num_tiles,),
        in_specs=[
            pl.BlockSpec(memory_space=pltpu.MemorySpace.SMEM),   # scalar params
            pl.BlockSpec((TN, L), lambda i: (i, 0)),
        ],
        out_specs=pl.BlockSpec((TN, L), lambda i: (i, 0)),
        compiler_params=cparams,
    )(norm_params, x_flat)

    # Deliberate slab-then-slice: keeps kernel stores full-lane-width; the
    # narrow (Wm) view is a cheap XLA slice of the kernel result.
    out = out_flat[:N].reshape(N, H, W)
    x = out[:, None, :Ho, clinical_f_n:]                  # (N, 1, H-1, Wm)
    clinical = inputs[:, 0, 0, 0:clinical_f_n]            # (N, cf)
    return clinical, x


if __name__ == "__main__":
    key = jax.random.PRNGKey(0)
    k_in, k_w = jax.random.split(key, 2)

    # Small shapes consistent with the module (args.clinical_feature_num = 4).
    N, C, H, W = 2, 1, 16, 16
    clinical_f_n = 4

    inputs = jax.random.normal(k_in, (N, C, H, W), dtype=jnp.float32)
    # conv weight (out=1, in=1, kh=2, kw=1); BatchNorm2d default init.
    conv_w = 0.5 * jax.random.normal(k_w, (1, 1, 2, 1), dtype=jnp.float32)
    bn_gamma = jnp.ones((1,), jnp.float32)
    bn_beta = jnp.zeros((1,), jnp.float32)

    clinical, x = longitudinal_ccnn_2_forward(
        inputs, conv_w, bn_gamma, bn_beta, clinical_f_n)
    jax.block_until_ready((clinical, x))

    # Pure-JAX reference (two-pass BN statistics, unfolded epilogue).
    x_mri = inputs[:, :, :, clinical_f_n:]
    y = (conv_w[0, 0, 0, 0] * x_mri[:, :, :-1, :]
         + conv_w[0, 0, 1, 0] * x_mri[:, :, 1:, :])
    mean = y.mean()
    var = ((y - mean) ** 2).mean()
    yhat = (y - mean) / jnp.sqrt(var + 1e-5) * bn_gamma[0] + bn_beta[0]
    ref_x = jnp.where(yhat >= 0, yhat, 0.1 * yhat)
    ref_clinical = inputs[:, 0, 0, 0:clinical_f_n]

    assert x.shape == (N, 1, H - 1, W - clinical_f_n), x.shape
    assert clinical.shape == (N, clinical_f_n), clinical.shape
    assert jnp.allclose(x, ref_x, atol=1e-4, rtol=1e-4)
    assert jnp.allclose(clinical, ref_clinical)

    print("KERNEL_OK")
</pallas_src>

<mosaic_0001>
module attributes {stable_mosaic.version = 11 : i64} {
  func.func @kernel(%arg0: i32, %arg1: memref<2xf32, #tpu.memory_space<smem>>, %arg2: memref<2x256xf32, #tpu.memory_space<vmem>>, %arg3: memref<1x8x128xf32, #tpu.memory_space<vmem>>) attributes {dimension_semantics = [#tpu.dimension_semantics<parallel>], iteration_bounds = array<i64: 1>, scalar_prefetch = 0 : i64, scratch_operands = 0 : i64, tpu.core_type = #tpu.core_type<tc>, window_params = [{transform_indices = @transform_0, window_bounds = array<i64: 2>}, {transform_indices = @transform_1, window_bounds = array<i64: 2, 256>}, {transform_indices = @transform_2, window_bounds = array<i64: 1, 8, 128>}]} {
    %c0 = arith.constant 0 : index
    %c0_0 = arith.constant 0 : index
    %0 = vector.load %arg2[%c0, %c0_0] : memref<2x256xf32, #tpu.memory_space<vmem>>, vector<2x256xf32>
    %c0_1 = arith.constant 0 : index
    %1 = memref.load %arg1[%c0_1] : memref<2xf32, #tpu.memory_space<smem>>
    %c1 = arith.constant 1 : index
    %2 = memref.load %arg1[%c1] : memref<2xf32, #tpu.memory_space<smem>>
    %c240_i32 = arith.constant 240 : i32
    %3 = tpu.dynamic_rotate %0 by %c240_i32 dim 1 : vector<2x256xf32>, i32 -> vector<2x256xf32>
    %4 = vector.broadcast %1 : f32 to vector<2x256xf32>
    %5 = arith.mulf %4, %0 : vector<2x256xf32>
    %6 = vector.broadcast %2 : f32 to vector<2x256xf32>
    %7 = arith.mulf %6, %3 : vector<2x256xf32>
    %8 = arith.addf %5, %7 : vector<2x256xf32>
    %9 = tpu.iota {dimensions = array<i32: 1>} : vector<2x256xi32>
    %c16_i32 = arith.constant 16 : i32
    %c0_i32 = arith.constant 0 : i32
    %10 = arith.cmpi eq, %c16_i32, %c0_i32 : i32
    %c1_i32 = arith.constant 1 : i32
    %11 = arith.select %10, %c1_i32, %c16_i32 : i32
    %12 = vector.broadcast %11 : i32 to vector<2x256xi32>
    %13 = arith.remsi %9, %12 : vector<2x256xi32>
    %c0_i32_2 = arith.constant 0 : i32
    %14 = vector.broadcast %c0_i32_2 : i32 to vector<2x256xi32>
    %15 = arith.cmpi ne, %13, %14 : vector<2x256xi32>
    %c0_i32_3 = arith.constant 0 : i32
    %16 = vector.broadcast %c0_i32_3 : i32 to vector<2x256xi32>
    %17 = arith.cmpi slt, %13, %16 : vector<2x256xi32>
    %c0_i32_4 = arith.constant 0 : i32
    %18 = arith.cmpi slt, %11, %c0_i32_4 : i32
    %19 = vector.broadcast %18 : i1 to vector<2x256xi1>
    %20 = vector.broadcast %19 : vector<2x256xi1> to vector<2x256xi1>
    %21 = arith.xori %17, %20 : vector<2x256xi1>
    %22 = arith.andi %21, %15 : vector<2x256xi1>
    %23 = vector.broadcast %11 : i32 to vector<2x256xi32>
    %24 = arith.addi %13, %23 : vector<2x256xi32>
    %25 = arith.select %22, %24, %13 : vector<2x256xi1>, vector<2x256xi32>
    %c4_i32 = arith.constant 4 : i32
    %26 = vector.broadcast %c4_i32 : i32 to vector<2x256xi32>
    %27 = arith.cmpi sge, %25, %26 : vector<2x256xi32>
    %c240_i32_5 = arith.constant 240 : i32
    %28 = vector.broadcast %c240_i32_5 : i32 to vector<2x256xi32>
    %29 = arith.cmpi slt, %9, %28 : vector<2x256xi32>
    %30 = arith.andi %27, %29 : vector<2x256xi1>
    %cst = arith.constant 0.000000e+00 : f32
    %31 = vector.broadcast %cst : f32 to vector<2x256xf32>
    %32 = arith.select %30, %8, %31 : vector<2x256xi1>, vector<2x256xf32>
    %33 = vector.shape_cast %32 : vector<2x256xf32> to vector<1x2x256xf32>
    %cst_6 = arith.constant dense<0.000000e+00> : vector<1xf32>
    %34 = vector.multi_reduction <add>, %33, %cst_6 [1, 2] : vector<1x2x256xf32> to vector<1xf32>
    %35 = vector.shape_cast %34 : vector<1xf32> to vector<1x1x1xf32>
    %36 = vector.extract %35[0, 0, 0] : f32 from vector<1x1x1xf32>
    %37 = arith.mulf %32, %32 : vector<2x256xf32>
    %38 = vector.shape_cast %37 : vector<2x256xf32> to vector<1x2x256xf32>
    %cst_7 = arith.constant dense<0.000000e+00> : vector<1xf32>
    %39 = vector.multi_reduction <add>, %38, %cst_7 [1, 2] : vector<1x2x256xf32> to vector<1xf32>
    %40 = vector.shape_cast %39 : vector<1xf32> to vector<1x1x1xf32>
    %41 = vector.extract %40[0, 0, 0] : f32 from vector<1x1x1xf32>
    %42 = tpu.iota {dimensions = array<i32: 1>} : vector<8x128xi32>
    %43 = tpu.iota {dimensions = array<i32: 0>} : vector<8x128xi32>
    %c0_i32_8 = arith.constant 0 : i32
    %44 = vector.broadcast %c0_i32_8 : i32 to vector<8x128xi32>
    %45 = arith.cmpi eq, %43, %44 : vector<8x128xi32>
    %c0_i32_9 = arith.constant 0 : i32
    %46 = vector.broadcast %c0_i32_9 : i32 to vector<8x128xi32>
    %47 = arith.cmpi eq, %42, %46 : vector<8x128xi32>
    %48 = arith.andi %45, %47 : vector<8x128xi1>
    %c1_i32_10 = arith.constant 1 : i32
    %49 = vector.broadcast %c1_i32_10 : i32 to vector<8x128xi32>
    %50 = arith.cmpi eq, %42, %49 : vector<8x128xi32>
    %51 = arith.andi %45, %50 : vector<8x128xi1>
    %cst_11 = arith.constant 0.000000e+00 : f32
    %52 = vector.broadcast %41 : f32 to vector<8x128xf32>
    %53 = vector.broadcast %cst_11 : f32 to vector<8x128xf32>
    %54 = arith.select %51, %52, %53 : vector<8x128xi1>, vector<8x128xf32>
    %55 = vector.broadcast %36 : f32 to vector<8x128xf32>
    %56 = arith.select %48, %55, %54 : vector<8x128xi1>, vector<8x128xf32>
    %c0_12 = arith.constant 0 : index
    %c0_13 = arith.constant 0 : index
    %c0_14 = arith.constant 0 : index
    %57 = vector.load %arg3[%c0_12, %c0_13, %c0_14] : memref<1x8x128xf32, #tpu.memory_space<vmem>>, vector<1x8x128xf32>
    %58 = vector.shape_cast %57 : vector<1x8x128xf32> to vector<8x128xf32>
    %59 = vector.shape_cast %56 : vector<8x128xf32> to vector<1x8x128xf32>
    tpu.vector_store %arg3[%c0_12, %c0_13, %c0_14], %59 {strides = array<i32>} : memref<1x8x128xf32, #tpu.memory_space<vmem>>, vector<1x8x128xf32>,
    return
  }
  func.func @transform_0(%arg0: i32) -> i32 {
    %c0_i32 = arith.constant 0 : i32
    %c0_i32_0 = arith.constant 0 : i32
    return %c0_i32 : i32
  }
  func.func @transform_1(%arg0: i32) -> (i32, i32) {
    %c0_i32 = arith.constant 0 : i32
    %c0_i32_0 = arith.constant 0 : i32
    return %arg0, %c0_i32 : i32, i32
  }
  func.func @transform_2(%arg0: i32) -> (i32, i32, i32) {
    %c0_i32 = arith.constant 0 : i32
    %c0_i32_0 = arith.constant 0 : i32
    %c0_i32_1 = arith.constant 0 : i32
    return %arg0, %c0_i32, %c0_i32_0 : i32, i32, i32
  }
}

</mosaic_0001>

<llo_original>
// kernel: tpu_custom_call.1
$region0: #{tpu_custom_call.1}
  #allocation0 [shape = 'u32[]', space=smem, size = 0x4, offset = 0x4, fixed_abs, tag = 'smem constant byte address 0x4 - core index']
  #allocation1 [shape = 'u32[144,128]{1,0:T(1,128)}', space=vmem, size = 0x12000, scoped, tag = 'internal scratch']
  %s0 = inlined_call_operand.hbm [shape: f32[2], index: 0, kind: input, shape index: {}]
  %s1 = inlined_call_operand.hbm [shape: f32[2,256], index: 1, kind: input, shape index: {}]
  %s2 = inlined_call_operand.hbm [shape: f32[1,8,128], index: 2, kind: output, shape index: {}]
  %s3 = sld [smem:[#allocation0]]
  $region26: #{tpu_custom_call.1} parent=0
    _
  %s5 = ssub.s32 1, %s3
  %s6 = scalar_select 0, %s5, %s3
  $region1: #{tpu_custom_call.1} parent=0
    #allocation2 [shape = 'u8[512]{0}', space=smem, size = 0x200, scoped, tag = 'input window, operand 0, single buffered']
    #allocation3 [shape = 's32[1]{0}', space=sflag, size = 0x4, scoped, tag = 'scoped memory for tpu_custom_call.1']
    #allocation4 [shape = 's32[1]{0}', space=sflag, size = 0x4, scoped, tag = 'scoped memory for tpu_custom_call.1']
    #allocation5 [shape = 's32[1]{0}', space=sflag, size = 0x4, scoped, tag = 'scoped memory for tpu_custom_call.1']
    #allocation6 [shape = 'u8[2048]{0}', space=vmem, size = 0x800, scoped, tag = 'input window, operand 1, single buffered']
    #allocation7 [shape = 'u8[4096]{0}', space=vmem, size = 0x1000, scoped, tag = 'output window, operand 0, single buffered']
    %7 = vsyncpa [#allocation5], 0
    %8 = vsyncpa [#allocation3], 0
    %9 = vsyncpa [#allocation4], 0
    // Predicated region
    $region2: #{tpu_custom_call.1} parent=1 // pred_check
      _
    $region3: #{tpu_custom_call.1} parent=1 // pred_check_branch
      %11 = sbr.rel (0) target = $region5
    $region4: #{tpu_custom_call.1} parent=1 // pred_region
      %s13 = ssub.s32 16, 16
      %14 = vsyncadd [#allocation5], %s13
      %17 = dma.hbm_to_smem %s0, 16, [#allocation2], [#allocation5]
    $region5: #{tpu_custom_call.1} parent=1 // pred_fallthru
      _
    // Predicated region
    $region6: #{tpu_custom_call.1} parent=1 // pred_check
      _
    $region7: #{tpu_custom_call.1} parent=1 // pred_check_branch
      %19 = sbr.rel (0) target = $region9
    $region8: #{tpu_custom_call.1} parent=1 // pred_region
      %s21 = ssub.s32 64, 64
      %22 = vsyncadd [#allocation3], %s21
      %s24 = sshll.u32 [#allocation6], 4
      %s25 = int_to_ptr.vmem [resolvable:$true] %s24
      %27 = dma.hbm_to_vmem [thread:$0]  %s1, 64, %s25, [#allocation3]
    $region9: #{tpu_custom_call.1} parent=1 // pred_fallthru
      _
    // Predicated region
    $region10: #{tpu_custom_call.1} parent=1 // pred_check
      _
    $region11: #{tpu_custom_call.1} parent=1 // pred_check_branch
      %29 = sbr.rel (0) target = $region13
    $region12: #{tpu_custom_call.1} parent=1 // pred_region
      %30 = dma.done [#allocation5], 16
    $region13: #{tpu_custom_call.1} parent=1 // pred_fallthru
      _
    // Predicated region
    $region14: #{tpu_custom_call.1} parent=1 // pred_check
      _
    $region15: #{tpu_custom_call.1} parent=1 // pred_check_branch
      %32 = sbr.rel (0) target = $region17
    $region16: #{tpu_custom_call.1} parent=1 // pred_region
      %33 = dma.done [#allocation3], 64
    $region17: #{tpu_custom_call.1} parent=1 // pred_fallthru
      _
    %34 = sfence
    %v35 = vld [vmem:[#allocation6] sm:$0xf]
    %s36 = sld [smem:[#allocation2]]
    %s37 = sld [smem:[#allocation2 + $0x1]]
    %v40 = vunpack.c.l.s4 1983009808
    %v41 = vunpack.c.0.s8 %v40
    %v42 = vlaneseq
    %v43 = vshrl.u32 %v42, 7
    %v44 = vsub.s32 %v41, %v43
    %v45 = vrot.slane %v35, %v44
    %v46 = vcombine.high %v45, %v45
    %49 = vrot.lane.b32.xlu0 %v45, 112
    %v50 = vpop.permute.xlu0 %49
    %51 = vrot.lane.b32.xlu0 %v46, 112
    %v52 = vpop.permute.xlu0 %51
    %v53 = vlaneseq
    %v54 = vand.u32 %v53, 127
    %vm55 = vcmp.lt.s32.totalorder %v54, 112
    %v56 = vsel %vm55, %v50, %v52
    %v57 = vsel %vm55, %v52, %v50
    %v58 = vstv %s36
    %v59 = vmul.f32 %v58, %v35
    %v60 = vstv %s37
    %v61 = vmul.f32 %v60, %v56
    %v62 = vmul.f32 %v60, %v57
    %v65 = vcombine.low %v61, %v62
    %v67 = vunpack.c.l.s4 1983009808
    %v68 = vunpack.c.0.s8 %v67
    %v69 = vlaneseq
    %v70 = vshrl.u32 %v69, 7
    %v71 = vsub.s32 %v68, %v70
    %v72 = vrot.slane %v65, %v71
    %v74 = vadd.f32 %v59, %v72
    %v75 = vadd.s32 %v54, 128
    %vm76 = vcmp.lt.s32.totalorder %v54, 0
    %v77 = vsub.s32 0, %v54
    %v78 = vsel %vm76, %v77, %v54
    %v79 = vshrl.u32 %v78, 4
    %v80 = vand.u32 %v78, 15
    %v81 = vsub.s32 0, %v80
    %v82 = vsel %vm76, %v81, %v80
    %vm83 = vcmp.lt.s32.totalorder %v75, 0
    %v84 = vsub.s32 0, %v75
    %v85 = vsel %vm83, %v84, %v75
    %v86 = vshrl.u32 %v85, 4
    %v87 = vand.u32 %v85, 15
    %v88 = vsub.s32 0, %v87
    %v89 = vsel %vm83, %v88, %v87
    %vm90 = vcmp.ne.s32.totalorder %v82, 0
    %vm91 = vcmp.ne.s32.totalorder %v89, 0
    %vm92 = vcmp.lt.s32.totalorder %v82, 0
    %vm93 = vcmp.lt.s32.totalorder %v89, 0
    %vm94 = vmand %vm92, %vm90
    %vm95 = vmand %vm93, %vm91
    %v96 = vadd.s32 %v82, 16
    %v97 = vadd.s32 %v89, 16
    %v98 = vsel %vm94, %v96, %v82
    %v99 = vsel %vm95, %v97, %v89
    %vm100 = vcmp.ge.s32.totalorder %v98, 4
    %vm101 = vcmp.ge.s32.totalorder %v99, 4
    %vm102 = vcmp.lt.s32.totalorder %v54, 240
    %vm103 = vcmp.lt.s32.totalorder %v75, 240
    %vm104 = vmand %vm100, %vm102
    %vm105 = vmand %vm101, %vm103
    %v108 = vunpack.c.l.s4 1983009808
    %v109 = vunpack.c.0.s8 %v108
    %v110 = vlaneseq
    %v111 = vshrl.u32 %v110, 7
    %v112 = vsub.s32 %v109, %v111
    %v113 = vrot.slane %v74, %v112
    %v114 = vcombine.high %v113, %v113
    %v117 = vsel %vm104, %v113, 0.0
    %v118 = vsel %vm105, %v114, 0.0
    %vm119 = vcmask 1041408
    %v120 = vsel %vm119, %v117, 0.0
    %v121 = vsel %vm119, %v118, 0.0
    %v122 = vadd.f32 %v120, %v121
    %123 = vadd.xlane.f32.xlu0 %v122
    %v124 = vpop.xlane.xlu0 %123
    %v125 = vrot.slane %v124, 4
    %v126 = vadd.f32 %v124, %v125
    %v127 = vrot.slane %v126, 2
    %v128 = vadd.f32 %v126, %v127
    %v129 = vrot.slane %v128, 1
    %v130 = vadd.f32 %v128, %v129
    %s131 = vtos %v130
    %v132 = vmul.f32 %v117, %v117
    %v133 = vmul.f32 %v118, %v118
    %v134 = vsel %vm119, %v132, 0.0
    %v135 = vsel %vm119, %v133, 0.0
    %v136 = vadd.f32 %v134, %v135
    %137 = vadd.xlane.f32.xlu0 %v136
    %v138 = vpop.xlane.xlu0 %137
    %v139 = vrot.slane %v138, 4
    %v140 = vadd.f32 %v138, %v139
    %v141 = vrot.slane %v140, 2
    %v142 = vadd.f32 %v140, %v141
    %v143 = vrot.slane %v142, 1
    %v144 = vadd.f32 %v142, %v143
    %s145 = vtos %v144
    %v146 = vlaneseq
    %v147 = vshrl.u32 %v146, 7
    %vm148 = vcmp.eq.s32.totalorder %v147, 0
    %vm149 = vcmp.eq.s32.totalorder %v54, 0
    %vm150 = vmand %vm148, %vm149
    %vm151 = vcmp.eq.s32.totalorder %v54, 1
    %vm152 = vmand %vm148, %vm151
    %v153 = vstv %s145
    %v154 = vsel %vm152, %v153, 0.0
    %v155 = vstv %s131
    %v156 = vsel %vm150, %v155, %v154
    %157 = vst [vmem:[#allocation7] sm:$0xff] %v156
    // Predicated region
    $region18: #{tpu_custom_call.1} parent=1 // pred_check
      _
    $region19: #{tpu_custom_call.1} parent=1 // pred_check_branch
      %159 = sbr.rel (0) target = $region21
    $region20: #{tpu_custom_call.1} parent=1 // pred_region
      %s161 = ssub.s32 128, 128
      %162 = vsyncadd [#allocation4], %s161
      %s164 = sshll.u32 [#allocation7], 4
      %s165 = int_to_ptr.vmem [resolvable:$true] %s164
      %167 = dma.vmem_to_hbm [thread:$0]  %s165, 128, %s2, [#allocation4]
    $region21: #{tpu_custom_call.1} parent=1 // pred_fallthru
      _
    // Predicated region
    $region22: #{tpu_custom_call.1} parent=1 // pred_check
      _
    $region23: #{tpu_custom_call.1} parent=1 // pred_check_branch
      %169 = sbr.rel (0) target = $region25
    $region24: #{tpu_custom_call.1} parent=1 // pred_region
      %170 = dma.done [#allocation4], 128
    $region25: #{tpu_custom_call.1} parent=1 // pred_fallthru
      _
    %171 = vsyncpa [#allocation3], 1
    %172 = vsyncpa [#allocation4], 1
    %173 = vsyncpa [#allocation5], 1

</llo_original>
